<compile_context>
chip_gen: v7x
topology: tpu7x:2x2x1
jax: 0.10.0
libtpu: 0.0.40
codegen_flags: <defaults>
</compile_context>

<pallas_src>
import jax
import jax.numpy as jnp
from jax import lax
from jax.experimental import pallas as pl
from jax.experimental.pallas import tpu as pltpu

LANES = 128
TARGET_BLOCK_BYTES = 1 << 20   # ~1 MiB for the widest input stream per block
CHUNK_MAX_ROWS = 256           # inner accumulation chunk (32 f32 vregs live)
NUM_SLICES_MAX = 2             # leading "parallel" grid axis (v7x: 2 TCs/chip)


def _cdiv(a, b):
    return -(-a // b)


def _round_up(x, m):
    return _cdiv(x, m) * m


def _sublane_multiple(dtype):
    # Native sublane tile: 8 rows (4-byte dtypes), 16 (2-byte), 32 (1-byte).
    return 8 * max(1, 4 // jnp.dtype(dtype).itemsize)


_KEEP_ON_WIRE = frozenset(
    jnp.dtype(d) for d in (jnp.float32, jnp.bfloat16, jnp.float16,
                           jnp.int8, jnp.uint8, jnp.int32, jnp.uint32))


def _wire_dtype(dtype):
    """Dtype an operand is streamed with; the f32 up-cast happens in-kernel."""
    dtype = jnp.dtype(dtype)
    if dtype == jnp.dtype(jnp.bool_):
        return jnp.dtype(jnp.int8)      # 1 B/elem masks stay 1 B on the wire
    if dtype in _KEEP_ON_WIRE:
        return dtype
    return jnp.dtype(jnp.float32)       # anything exotic: stream as f32


def _make_dice_kernel(*, block_rows, chunk_rows, num_chunks, rows,
                      last_row_len, needs_mask):
    """Builds the kernel for one static tiling configuration."""

    def kernel(x_ref, t_ref, out_ref):
        j = pl.program_id(1)

        # Output block index is constant along the "arbitrary" axis, so the
        # (1, 3, 8, 128) f32 block is resident across j and acts as the
        # accumulator; it is written back to HBM once per slice.
        @pl.when(j == 0)
        def _init():
            out_ref[...] = jnp.zeros_like(out_ref)

        # Intended first global row of this block (may exceed `rows` for the
        # clamped/duplicate tail block of the last slice -> fully masked).
        block_row0 = (pl.program_id(0) * pl.num_programs(1) + j) * block_rows

        def chunk_body(c, carry):
            inter, psum, tsum = carry
            r0 = pl.multiple_of(c * chunk_rows, chunk_rows)
            x = x_ref[pl.ds(r0, chunk_rows), :].astype(jnp.float32)
            t = t_ref[pl.ds(r0, chunk_rows), :].astype(jnp.float32)
            # sigmoid via a single EUP transcendental (tanh), not exp+divide.
            p = 0.5 * (jnp.tanh(0.5 * x) + 1.0)
            if needs_mask:
                # Element-level validity vs the true element count: padded /
                # out-of-bounds entries contribute exactly 0 to all three sums
                # (so no wrapper-side sigmoid(0)=0.5 correction is needed).
                # NOTE: int32 row indices -> fine for n < ~2.7e11 elements.
                grow = block_row0 + r0 + lax.broadcasted_iota(
                    jnp.int32, (chunk_rows, LANES), 0)
                lane = lax.broadcasted_iota(jnp.int32, (chunk_rows, LANES), 1)
                valid = (grow < rows - 1) | ((grow == rows - 1) &
                                             (lane < last_row_len))
                p = jnp.where(valid, p, 0.0)
                t = jnp.where(valid, t, 0.0)
            # (chunk_rows,128) -> (chunk_rows//8, 8, 128): leading-dim reshape
            # is free; the axis-0 sum is pure vreg-wise VPU addition.
            inter = inter + jnp.sum((p * t).reshape(-1, 8, LANES), axis=0)
            psum = psum + jnp.sum(p.reshape(-1, 8, LANES), axis=0)
            tsum = tsum + jnp.sum(t.reshape(-1, 8, LANES), axis=0)
            return inter, psum, tsum

        zero = jnp.zeros((8, LANES), jnp.float32)
        inter, psum, tsum = lax.fori_loop(
            0, num_chunks, chunk_body, (zero, zero, zero), unroll=True)

        out_ref[0, 0] += inter
        out_ref[0, 1] += psum
        out_ref[0, 2] += tsum

    return kernel


def dice_loss(inputs, targets, smooth=1.0):
    """Pallas implementation of DiceLoss.forward (returns a scalar)."""
    x = inputs.reshape(-1)
    t = targets.reshape(-1)
    if x.shape[0] != t.shape[0]:
        raise ValueError("inputs and targets must have the same element count")
    n = x.shape[0]
    if n == 0:
        return jnp.float32(0.0)

    # Keep narrow dtypes narrow on the wire; cast to f32 happens in-kernel.
    x = x.astype(_wire_dtype(x.dtype))
    t = t.astype(_wire_dtype(t.dtype))

    rows = _cdiv(n, LANES)
    last_row_len = n - (rows - 1) * LANES            # in [1, 128], static
    sub = max(_sublane_multiple(x.dtype), _sublane_multiple(t.dtype))
    itemsize = int(max(x.dtype.itemsize, t.dtype.itemsize))

    # Block sizing by wire dtype: widest stream ~1 MiB per block.
    max_block_rows = max(sub, TARGET_BLOCK_BYTES // (LANES * itemsize))
    if rows >= max_block_rows:
        block_rows = max_block_rows
    else:
        block_rows = _round_up(rows, sub)
    chunk_rows = min(CHUNK_MAX_ROWS, block_rows)
    block_rows = _round_up(block_rows, chunk_rows)
    num_chunks = block_rows // chunk_rows

    total_blocks = _cdiv(rows, block_rows)
    num_slices = min(NUM_SLICES_MAX, total_blocks)
    steps = _cdiv(total_blocks, num_slices)

    needs_mask = (num_slices * steps * block_rows != rows) or (rows * LANES != n)

    # Only a sub-128 ragged tail still needs an HBM pad (to make the
    # (rows, 128) reshape legal); block alignment is handled by partial-block
    # DMAs + in-kernel masking, never by padding.
    # TODO(synk): go fully pad-free for ragged N with a 1-D BlockSpec stream.
    pad = rows * LANES - n
    if pad:
        x = jnp.pad(x, (0, pad))
        t = jnp.pad(t, (0, pad))
    xp = x.reshape(rows, LANES)
    tp = t.reshape(rows, LANES)

    kernel = _make_dice_kernel(
        block_rows=block_rows, chunk_rows=chunk_rows, num_chunks=num_chunks,
        rows=rows, last_row_len=last_row_len, needs_mask=needs_mask)

    last_block = total_blocks - 1

    def in_map(s, j):
        # Clamp so a (fully masked) tail block of the last slice never indexes
        # past the array; its contribution is zeroed by the in-kernel mask.
        return (jnp.minimum(s * steps + j, last_block), 0)

    in_block = pl.BlockSpec((block_rows, LANES), in_map)
    out_block = pl.BlockSpec((1, 3, 8, LANES), lambda s, j: (s, 0, 0, 0))

    parts = pl.pallas_call(
        kernel,
        out_shape=jax.ShapeDtypeStruct((num_slices, 3, 8, LANES), jnp.float32),
        grid_spec=pltpu.PrefetchScalarGridSpec(
            num_scalar_prefetch=0,
            grid=(num_slices, steps),
            in_specs=[in_block, in_block],
            out_specs=out_block,
        ),
        compiler_params=pltpu.CompilerParams(
            dimension_semantics=("parallel", "arbitrary")),
    )(xp, tp)

    sums = jnp.sum(parts, axis=(0, 2, 3))            # (3,): inter, sum(p), sum(t)
    intersection, inputs_sum, targets_sum = sums[0], sums[1], sums[2]
    smooth = jnp.float32(smooth)
    dice = (2.0 * intersection + smooth) / (inputs_sum + targets_sum + smooth)
    return 1.0 - dice


def _reference_dice_loss(inputs, targets, smooth=1.0):
    p = jax.nn.sigmoid(inputs.reshape(-1).astype(jnp.float32))
    t = targets.reshape(-1).astype(jnp.float32)
    intersection = jnp.sum(p * t)
    dice = (2.0 * intersection + smooth) / (jnp.sum(p) + jnp.sum(t) + smooth)
    return 1.0 - dice


if __name__ == "__main__":
    key = jax.random.PRNGKey(0)
    k1, k2, k3, k4, k5 = jax.random.split(key, 5)

    # Case 1: aligned NCHW logits + float mask (fast path, no masking needed).
    x1 = jax.random.normal(k1, (2, 4, 16, 16), dtype=jnp.float32)
    t1 = (jax.random.uniform(k2, (2, 4, 16, 16)) > 0.5).astype(jnp.float32)
    l1 = jax.block_until_ready(dice_loss(x1, t1, smooth=1.0))
    r1 = _reference_dice_loss(x1, t1, smooth=1.0)
    assert jnp.allclose(l1, r1, rtol=1e-4, atol=1e-5), (l1, r1)

    # Case 2: bool mask streamed as int8 (mixed dtypes + in-kernel row masking).
    t2 = jax.random.uniform(k3, (2, 4, 16, 16)) > 0.5
    l2 = jax.block_until_ready(dice_loss(x1, t2, smooth=1.0))
    r2 = _reference_dice_loss(x1, t2, smooth=1.0)
    assert jnp.allclose(l2, r2, rtol=1e-4, atol=1e-5), (l2, r2)

    # Case 3: ragged element count (sub-128 tail pad + element-level masking).
    x3 = jax.random.normal(k4, (3, 5, 7, 11), dtype=jnp.float32)
    t3 = (x3 > 0).astype(jnp.float32)
    l3 = jax.block_until_ready(dice_loss(x3, t3, smooth=1.0))
    r3 = _reference_dice_loss(x3, t3, smooth=1.0)
    assert jnp.allclose(l3, r3, rtol=1e-4, atol=1e-5), (l3, r3)

    # Case 4: multi-block input -> 2 parallel slices, chunked inner loop,
    # clamped duplicate tail block, bool targets on the int8 wire.
    x4 = jax.random.normal(k5, (2, 3, 512, 256), dtype=jnp.float32)
    t4 = jax.random.uniform(k2, (2, 3, 512, 256)) > 0.5
    l4 = jax.block_until_ready(dice_loss(x4, t4, smooth=1.0))
    r4 = _reference_dice_loss(x4, t4, smooth=1.0)
    assert jnp.allclose(l4, r4, rtol=1e-4, atol=1e-5), (l4, r4)

    print("KERNEL_OK")
</pallas_src>

<mosaic_0001>
module attributes {stable_mosaic.version = 11 : i64} {
  func.func @kernel(%arg0: i32, %arg1: i32, %arg2: memref<16x128xf32, #tpu.memory_space<vmem>>, %arg3: memref<16x128xf32, #tpu.memory_space<vmem>>, %arg4: memref<1x3x8x128xf32, #tpu.memory_space<vmem>>) attributes {dimension_semantics = [#tpu.dimension_semantics<parallel>, #tpu.dimension_semantics<arbitrary>], iteration_bounds = array<i64: 1, 1>, scalar_prefetch = 0 : i64, scratch_operands = 0 : i64, tpu.core_type = #tpu.core_type<tc>, window_params = [{transform_indices = @transform_0, window_bounds = array<i64: 16, 128>}, {transform_indices = @transform_1, window_bounds = array<i64: 16, 128>}, {transform_indices = @transform_2, window_bounds = array<i64: 1, 3, 8, 128>}]} {
    %c0_i32 = arith.constant 0 : i32
    %0 = arith.cmpi eq, %arg1, %c0_i32 : i32
    %1 = arith.extui %0 : i1 to i32
    %c0_i32_0 = arith.constant 0 : i32
    %2 = arith.cmpi ne, %1, %c0_i32_0 : i32
    scf.if %2 {
      %cst_31 = arith.constant 0.000000e+00 : f32
      %45 = vector.broadcast %cst_31 : f32 to vector<1x3x8x128xf32>
      %c0_32 = arith.constant 0 : index
      %c0_33 = arith.constant 0 : index
      %c0_34 = arith.constant 0 : index
      %c0_35 = arith.constant 0 : index
      %46 = vector.load %arg4[%c0_32, %c0_33, %c0_34, %c0_35] : memref<1x3x8x128xf32, #tpu.memory_space<vmem>>, vector<1x3x8x128xf32>
      tpu.vector_store %arg4[%c0_32, %c0_33, %c0_34, %c0_35], %45 {strides = array<i32>} : memref<1x3x8x128xf32, #tpu.memory_space<vmem>>, vector<1x3x8x128xf32>,
    } else {
    }
    %cst = arith.constant 0.000000e+00 : f32
    %3 = vector.broadcast %cst : f32 to vector<8x128xf32>
    %c0_i32_1 = arith.constant 0 : i32
    %c16_i32 = arith.constant 16 : i32
    %4 = arith.muli %c0_i32_1, %c16_i32 : i32
    %5 = tpu.assume_multiple %4, 16 : i32
    %6 = arith.index_cast %5 : i32 to index
    %c0 = arith.constant 0 : index
    %7 = vector.load %arg2[%6, %c0] : memref<16x128xf32, #tpu.memory_space<vmem>>, vector<16x128xf32>
    %8 = arith.index_cast %5 : i32 to index
    %c0_2 = arith.constant 0 : index
    %9 = vector.load %arg3[%8, %c0_2] : memref<16x128xf32, #tpu.memory_space<vmem>>, vector<16x128xf32>
    %cst_3 = arith.constant 5.000000e-01 : f32
    %10 = vector.broadcast %cst_3 : f32 to vector<16x128xf32>
    %11 = arith.mulf %10, %7 : vector<16x128xf32>
    %12 = math.tanh %11 : vector<16x128xf32>
    %cst_4 = arith.constant 1.000000e+00 : f32
    %13 = vector.broadcast %cst_4 : f32 to vector<16x128xf32>
    %14 = arith.addf %12, %13 : vector<16x128xf32>
    %cst_5 = arith.constant 5.000000e-01 : f32
    %15 = vector.broadcast %cst_5 : f32 to vector<16x128xf32>
    %16 = arith.mulf %15, %14 : vector<16x128xf32>
    %17 = arith.mulf %16, %9 : vector<16x128xf32>
    %18 = vector.shape_cast %17 : vector<16x128xf32> to vector<2x8x128xf32>
    %cst_6 = arith.constant dense<0.000000e+00> : vector<8x128xf32>
    %19 = vector.multi_reduction <add>, %18, %cst_6 [0] : vector<2x8x128xf32> to vector<8x128xf32>
    %20 = arith.addf %3, %19 : vector<8x128xf32>
    %21 = vector.shape_cast %16 : vector<16x128xf32> to vector<2x8x128xf32>
    %cst_7 = arith.constant dense<0.000000e+00> : vector<8x128xf32>
    %22 = vector.multi_reduction <add>, %21, %cst_7 [0] : vector<2x8x128xf32> to vector<8x128xf32>
    %23 = arith.addf %3, %22 : vector<8x128xf32>
    %24 = vector.shape_cast %9 : vector<16x128xf32> to vector<2x8x128xf32>
    %cst_8 = arith.constant dense<0.000000e+00> : vector<8x128xf32>
    %25 = vector.multi_reduction <add>, %24, %cst_8 [0] : vector<2x8x128xf32> to vector<8x128xf32>
    %26 = arith.addf %3, %25 : vector<8x128xf32>
    %c1_i32 = arith.constant 1 : i32
    %c0_9 = arith.constant 0 : index
    %c0_10 = arith.constant 0 : index
    %c0_11 = arith.constant 0 : index
    %c0_12 = arith.constant 0 : index
    %27 = vector.load %arg4[%c0_9, %c0_10, %c0_11, %c0_12] : memref<1x3x8x128xf32, #tpu.memory_space<vmem>>, vector<1x1x8x128xf32>
    %28 = vector.shape_cast %27 : vector<1x1x8x128xf32> to vector<8x128xf32>
    %29 = arith.addf %28, %20 : vector<8x128xf32>
    %c0_13 = arith.constant 0 : index
    %c0_14 = arith.constant 0 : index
    %c0_15 = arith.constant 0 : index
    %c0_16 = arith.constant 0 : index
    %30 = vector.load %arg4[%c0_13, %c0_14, %c0_15, %c0_16] : memref<1x3x8x128xf32, #tpu.memory_space<vmem>>, vector<1x1x8x128xf32>
    %31 = vector.shape_cast %30 : vector<1x1x8x128xf32> to vector<8x128xf32>
    %32 = vector.shape_cast %29 : vector<8x128xf32> to vector<1x1x8x128xf32>
    tpu.vector_store %arg4[%c0_13, %c0_14, %c0_15, %c0_16], %32 {strides = array<i32>} : memref<1x3x8x128xf32, #tpu.memory_space<vmem>>, vector<1x1x8x128xf32>,
    %c0_17 = arith.constant 0 : index
    %c1 = arith.constant 1 : index
    %c0_18 = arith.constant 0 : index
    %c0_19 = arith.constant 0 : index
    %33 = vector.load %arg4[%c0_17, %c1, %c0_18, %c0_19] : memref<1x3x8x128xf32, #tpu.memory_space<vmem>>, vector<1x1x8x128xf32>
    %34 = vector.shape_cast %33 : vector<1x1x8x128xf32> to vector<8x128xf32>
    %35 = arith.addf %34, %23 : vector<8x128xf32>
    %c0_20 = arith.constant 0 : index
    %c1_21 = arith.constant 1 : index
    %c0_22 = arith.constant 0 : index
    %c0_23 = arith.constant 0 : index
    %36 = vector.load %arg4[%c0_20, %c1_21, %c0_22, %c0_23] : memref<1x3x8x128xf32, #tpu.memory_space<vmem>>, vector<1x1x8x128xf32>
    %37 = vector.shape_cast %36 : vector<1x1x8x128xf32> to vector<8x128xf32>
    %38 = vector.shape_cast %35 : vector<8x128xf32> to vector<1x1x8x128xf32>
    tpu.vector_store %arg4[%c0_20, %c1_21, %c0_22, %c0_23], %38 {strides = array<i32>} : memref<1x3x8x128xf32, #tpu.memory_space<vmem>>, vector<1x1x8x128xf32>,
    %c0_24 = arith.constant 0 : index
    %c2 = arith.constant 2 : index
    %c0_25 = arith.constant 0 : index
    %c0_26 = arith.constant 0 : index
    %39 = vector.load %arg4[%c0_24, %c2, %c0_25, %c0_26] : memref<1x3x8x128xf32, #tpu.memory_space<vmem>>, vector<1x1x8x128xf32>
    %40 = vector.shape_cast %39 : vector<1x1x8x128xf32> to vector<8x128xf32>
    %41 = arith.addf %40, %26 : vector<8x128xf32>
    %c0_27 = arith.constant 0 : index
    %c2_28 = arith.constant 2 : index
    %c0_29 = arith.constant 0 : index
    %c0_30 = arith.constant 0 : index
    %42 = vector.load %arg4[%c0_27, %c2_28, %c0_29, %c0_30] : memref<1x3x8x128xf32, #tpu.memory_space<vmem>>, vector<1x1x8x128xf32>
    %43 = vector.shape_cast %42 : vector<1x1x8x128xf32> to vector<8x128xf32>
    %44 = vector.shape_cast %41 : vector<8x128xf32> to vector<1x1x8x128xf32>
    tpu.vector_store %arg4[%c0_27, %c2_28, %c0_29, %c0_30], %44 {strides = array<i32>} : memref<1x3x8x128xf32, #tpu.memory_space<vmem>>, vector<1x1x8x128xf32>,
    return
  }
  func.func @transform_0(%arg0: i32, %arg1: i32) -> (i32, i32) {
    %c1_i32 = arith.constant 1 : i32
    %0 = arith.muli %arg0, %c1_i32 : i32
    %1 = arith.addi %0, %arg1 : i32
    %c0_i32 = arith.constant 0 : i32
    %2 = arith.minsi %1, %c0_i32 : i32
    %c0_i32_0 = arith.constant 0 : i32
    %c0_i32_1 = arith.constant 0 : i32
    return %2, %c0_i32_0 : i32, i32
  }
  func.func @transform_1(%arg0: i32, %arg1: i32) -> (i32, i32) {
    %c1_i32 = arith.constant 1 : i32
    %0 = arith.muli %arg0, %c1_i32 : i32
    %1 = arith.addi %0, %arg1 : i32
    %c0_i32 = arith.constant 0 : i32
    %2 = arith.minsi %1, %c0_i32 : i32
    %c0_i32_0 = arith.constant 0 : i32
    %c0_i32_1 = arith.constant 0 : i32
    return %2, %c0_i32_0 : i32, i32
  }
  func.func @transform_2(%arg0: i32, %arg1: i32) -> (i32, i32, i32, i32) {
    %c0_i32 = arith.constant 0 : i32
    %c0_i32_0 = arith.constant 0 : i32
    %c0_i32_1 = arith.constant 0 : i32
    %c0_i32_2 = arith.constant 0 : i32
    return %arg0, %c0_i32, %c0_i32_0, %c0_i32_1 : i32, i32, i32, i32
  }
}

</mosaic_0001>

<llo_original>
// kernel: tpu_custom_call.1
$region0: #{tpu_custom_call.1}
  #allocation0 [shape = 'u32[]', space=smem, size = 0x4, offset = 0x4, fixed_abs, tag = 'smem constant byte address 0x4 - core index']
  #allocation1 [shape = 'u32[144,128]{1,0:T(1,128)}', space=vmem, size = 0x12000, scoped, tag = 'internal scratch']
  %s0 = inlined_call_operand.hbm [shape: f32[16,128], index: 0, kind: input, shape index: {}]
  %s1 = inlined_call_operand.hbm [shape: f32[16,128], index: 1, kind: input, shape index: {}]
  %s2 = inlined_call_operand.hbm [shape: f32[1,3,8,128], index: 2, kind: output, shape index: {}]
  %s3 = sld [smem:[#allocation0]]
  $region30: #{tpu_custom_call.1} parent=0
    _
  %s5 = ssub.s32 1, %s3
  %s6 = scalar_select 0, %s5, %s3
  $region1: #{tpu_custom_call.1} parent=0
    #allocation2 [shape = 'u8[8192]{0}', space=vmem, size = 0x2000, scoped, tag = 'input window, operand 0, single buffered']
    #allocation3 [shape = 's32[1]{0}', space=sflag, size = 0x4, scoped, tag = 'scoped memory for tpu_custom_call.1']
    #allocation4 [shape = 's32[1]{0}', space=sflag, size = 0x4, scoped, tag = 'scoped memory for tpu_custom_call.1']
    #allocation5 [shape = 'u8[8192]{0}', space=vmem, size = 0x2000, scoped, tag = 'input window, operand 1, single buffered']
    #allocation6 [shape = 's32[1]{0}', space=sflag, size = 0x4, scoped, tag = 'scoped memory for tpu_custom_call.1']
    #allocation7 [shape = 'u8[12288]{0}', space=vmem, size = 0x3000, scoped, tag = 'output window, operand 0, single buffered']
    %7 = vsyncpa [#allocation3], 0
    %8 = vsyncpa [#allocation6], 0
    %9 = vsyncpa [#allocation4], 0
    // Predicated region
    $region2: #{tpu_custom_call.1} parent=1 // pred_check
      _
    $region3: #{tpu_custom_call.1} parent=1 // pred_check_branch
      %11 = sbr.rel (0) target = $region5
    $region4: #{tpu_custom_call.1} parent=1 // pred_region
      %s12 = sadd.s32 0, 0
      %p13 = scmp.lt.s32.totalorder %s12, 0
      %s14 = scalar_select %p13, %s12, 0
      %s15 = smul.u32 2, %s14
      %s17 = ssub.s32 256, 256
      %18 = vsyncadd [#allocation3], %s17
      %s19 = smul.addr %s15, 128
      %s20 = scalar_lea.hbm %s0, %s19
      %s21 = sshll.u32 [#allocation2], 4
      %s22 = int_to_ptr.vmem [resolvable:$true] %s21
      %27 = dma.hbm_to_vmem [thread:$0]  %s20, 256, %s22, [#allocation3], 128, 128, 8
    $region5: #{tpu_custom_call.1} parent=1 // pred_fallthru
      _
    // Predicated region
    $region6: #{tpu_custom_call.1} parent=1 // pred_check
      _
    $region7: #{tpu_custom_call.1} parent=1 // pred_check_branch
      %29 = sbr.rel (0) target = $region9
    $region8: #{tpu_custom_call.1} parent=1 // pred_region
      %s30 = sadd.s32 0, 0
      %p31 = scmp.lt.s32.totalorder %s30, 0
      %s32 = scalar_select %p31, %s30, 0
      %s33 = smul.u32 2, %s32
      %s35 = ssub.s32 256, 256
      %36 = vsyncadd [#allocation6], %s35
      %s37 = smul.addr %s33, 128
      %s38 = scalar_lea.hbm %s1, %s37
      %s39 = sshll.u32 [#allocation5], 4
      %s40 = int_to_ptr.vmem [resolvable:$true] %s39
      %45 = dma.hbm_to_vmem [thread:$0]  %s38, 256, %s40, [#allocation6], 128, 128, 8
    $region9: #{tpu_custom_call.1} parent=1 // pred_fallthru
      _
    // Predicated region
    $region10: #{tpu_custom_call.1} parent=1 // pred_check
      _
    $region11: #{tpu_custom_call.1} parent=1 // pred_check_branch
      %47 = sbr.rel (0) target = $region13
    $region12: #{tpu_custom_call.1} parent=1 // pred_region
      %48 = dma.done [#allocation3], 256
    $region13: #{tpu_custom_call.1} parent=1 // pred_fallthru
      _
    // Predicated region
    $region14: #{tpu_custom_call.1} parent=1 // pred_check
      _
    $region15: #{tpu_custom_call.1} parent=1 // pred_check_branch
      %50 = sbr.rel (0) target = $region17
    $region16: #{tpu_custom_call.1} parent=1 // pred_region
      %51 = dma.done [#allocation6], 256
    $region17: #{tpu_custom_call.1} parent=1 // pred_fallthru
      _
    %s52 = sadd.s32 0, 0
    %p53 = scmp.lt.s32.totalorder %s52, 0
    %s54 = scalar_select %p53, %s52, 0
    %s55 = smul.u32 2, %s54
    %s56 = sadd.s32 0, 0
    %p57 = scmp.lt.s32.totalorder %s56, 0
    %s58 = scalar_select %p57, %s56, 0
    %s59 = smul.u32 2, %s58
    %p60 = scmp.eq.s32.totalorder 0, 0
    // Predicated region
    $region18: #{tpu_custom_call.1} parent=1 // pred_check
      %p61 = pneg %p60
    $region19: #{tpu_custom_call.1} parent=1 // pred_check_branch
      %63 = sbr.rel (%p61) target = $region21
    $region20: #{tpu_custom_call.1} parent=1 // pred_region
      %64 = vst [vmem:[#allocation7] sm:$0xff] 0.0
      %65 = vst [vmem:[#allocation7 + $0x8] sm:$0xff] 0.0
      %66 = vst [vmem:[#allocation7 + $0x10] sm:$0xff] 0.0
    $region21: #{tpu_custom_call.1} parent=1 // pred_fallthru
      _
    %v67 = vld [vmem:[#allocation2] sm:$0xff]
    %v68 = vld [vmem:[#allocation2 + $0x8] sm:$0xff]
    %v69 = vld [vmem:[#allocation5] sm:$0xff]
    %v70 = vld [vmem:[#allocation5 + $0x8] sm:$0xff]
    %v71 = vmul.f32 %v67, 0.5
    %v72 = vmul.f32 %v68, 0.5
    %v73 = vtanh.pop %v71
    %v74 = vtanh.pop %v72
    %v75 = vadd.f32 %v73, 1.0
    %v76 = vadd.f32 %v74, 1.0
    %v77 = vmul.f32 %v75, 0.5
    %v78 = vmul.f32 %v76, 0.5
    %v79 = vmul.f32 %v77, %v69
    %v80 = vmul.f32 %v78, %v70
    %v81 = vadd.f32 %v79, %v80
    %v82 = vadd.f32 %v81, 0.0
    %v83 = vadd.f32 %v77, %v78
    %v84 = vadd.f32 %v83, 0.0
    %v85 = vadd.f32 %v69, %v70
    %v86 = vadd.f32 %v85, 0.0
    %v87 = vld [vmem:[#allocation7] sm:$0xff]
    %v88 = vadd.f32 %v87, %v82
    %89 = vst [vmem:[#allocation7] sm:$0xff] %v88
    %s90 = scalar_lea.vmem [#allocation7], 8
    %v91 = vld [vmem:[%s90] sm:$0xff]
    %v92 = vadd.f32 %v91, %v84
    %93 = vst [vmem:[%s90] sm:$0xff] %v92
    %s94 = scalar_lea.vmem [#allocation7], 16
    %v95 = vld [vmem:[%s94] sm:$0xff]
    %v96 = vadd.f32 %v95, %v86
    %97 = vst [vmem:[%s94] sm:$0xff] %v96
    // Predicated region
    $region22: #{tpu_custom_call.1} parent=1 // pred_check
      _
    $region23: #{tpu_custom_call.1} parent=1 // pred_check_branch
      %99 = sbr.rel (0) target = $region25
    $region24: #{tpu_custom_call.1} parent=1 // pred_region
      %s101 = ssub.s32 384, 384
      %102 = vsyncadd [#allocation4], %s101
      %s103 = sshll.u32 [#allocation7], 4
      %s104 = int_to_ptr.vmem [resolvable:$true] %s103
      %109 = dma.vmem_to_hbm [thread:$0]  %s104, 384, %s2, [#allocation4], 128, 128, 8
    $region25: #{tpu_custom_call.1} parent=1 // pred_fallthru
      _
    // Predicated region
    $region26: #{tpu_custom_call.1} parent=1 // pred_check
      _
    $region27: #{tpu_custom_call.1} parent=1 // pred_check_branch
      %111 = sbr.rel (0) target = $region29
    $region28: #{tpu_custom_call.1} parent=1 // pred_region
      %112 = dma.done [#allocation4], 384
    $region29: #{tpu_custom_call.1} parent=1 // pred_fallthru
      _
    %113 = vsyncpa [#allocation3], 1
    %114 = vsyncpa [#allocation6], 1
    %115 = vsyncpa [#allocation4], 1

</llo_original>
